<compile_context>
chip_gen: v5e
topology: v5e:2x2
jax: 0.10.0
libtpu: 0.0.40
codegen_flags: <defaults>
</compile_context>

<pallas_src>
import jax
import jax.numpy as jnp
from jax.experimental import pallas as pl
from jax.experimental.pallas import tpu as pltpu


def _round_up(x, m):
    return ((x + m - 1) // m) * m


def _im2col(x, kernel_size, stride, padding, dtype):
    """Extract conv patches fully in `dtype` (bf16).

    x: (B, C, H, W) -> (B, Np, C*K*K) with feature order (c, kh, kw), plus (Ho, Wo).
    """
    B, C, H, W = x.shape
    K = kernel_size
    # Cast fused with the pad: everything downstream (stack/reshape/transpose)
    # stays bf16 so the expanded patch tensor is never written in f32.
    xp = jnp.pad(x.astype(dtype),
                 ((0, 0), (0, 0), (padding, padding), (padding, padding)))
    Ho = (H + 2 * padding - K) // stride + 1
    Wo = (W + 2 * padding - K) // stride + 1
    cols = []
    for di in range(K):
        for dj in range(K):
            sl = xp[:, :,
                    di: di + (Ho - 1) * stride + 1: stride,
                    dj: dj + (Wo - 1) * stride + 1: stride]      # (B, C, Ho, Wo)
            cols.append(sl)
    pat = jnp.stack(cols, axis=2)                                # (B, C, K*K, Ho, Wo)
    pat = pat.reshape(B, C * K * K, Ho * Wo)                     # feature = c*K*K + kh*K + kw
    pat = jnp.transpose(pat, (0, 2, 1))                          # (B, Np, F), Np = Ho*Wo
    return pat, (Ho, Wo)


def _proj_kernel(p_ref, w_ref, b_ref, o_ref):
    # p_ref: (tn, F) bf16   w_ref: (F, Dp) bf16   b_ref: (1, Dp) f32   o_ref: (tn, Dp) out_dtype
    acc = jnp.dot(p_ref[...], w_ref[...], preferred_element_type=jnp.float32)   # MXU, f32 acc
    o_ref[...] = (acc + b_ref[...]).astype(o_ref.dtype)


def patch_embed(x, w, b, *, kernel_size=7, stride=4, padding=2,
                tile_n=1024, compute_dtype=jnp.bfloat16,
                out_dtype=jnp.bfloat16, unpad_output=True):
    """PatchEmbed forward.

    x: (B, C_in, H, W); w: (D, C_in, K, K) torch layout; b: (D,).
    Returns (tokens (B, Np, D), (Ho, Wo)), or, with unpad_output=False, the
    flat lane-/token-padded (N_pad, Dp) tensor (padded rows hold just the bias)
    so a consumer can absorb the padding and skip the extra HBM un-pad pass.
    """
    B, C_in, H, W = x.shape
    D = w.shape[0]
    K = kernel_size
    F = C_in * K * K

    # bf16 im2col in the wrapper (overlapping strided windows are awkward as
    # non-overlapping BlockSpec tiles).  See TODO(synk) at top of file.
    patches, hw_shape = _im2col(x, K, stride, padding, compute_dtype)   # (B, Np, F) bf16
    Np = patches.shape[1]
    N_tot = B * Np

    # Lane-dense output: pad embed dim to a multiple of 128 (unmasked vst).
    Dp = _round_up(D, 128)

    # Flatten batch into the token axis; adaptive tile (multiple of 16 for bf16
    # sublane packing) sized to keep padding waste small; >= 2 grid steps so
    # v7x's second TensorCore always has independent parallel work.
    num_tiles = max(pl.cdiv(N_tot, tile_n), 2)
    tn = _round_up(pl.cdiv(N_tot, num_tiles), 16)
    N_pad = _round_up(N_tot, tn)

    patches = patches.reshape(N_tot, F)
    if N_pad != N_tot:
        patches = jnp.pad(patches, ((0, N_pad - N_tot), (0, 0)))

    w_flat = jnp.transpose(w.reshape(D, F), (1, 0))              # (F, D), matches (c, kh, kw)
    w_flat = jnp.pad(w_flat, ((0, 0), (0, Dp - D))).astype(compute_dtype)
    b_pad = jnp.pad(b, (0, Dp - D)).astype(jnp.float32).reshape(1, Dp)

    out_itemsize = jnp.dtype(out_dtype).itemsize
    cost = pl.CostEstimate(
        flops=2 * N_pad * F * Dp,
        transcendentals=0,
        bytes_accessed=(N_pad * F * 2 + F * Dp * 2 + Dp * 4 + N_pad * Dp * out_itemsize))

    out = pl.pallas_call(
        _proj_kernel,
        out_shape=jax.ShapeDtypeStruct((N_pad, Dp), out_dtype),
        grid_spec=pltpu.PrefetchScalarGridSpec(
            num_scalar_prefetch=0,
            grid=(N_pad // tn,),
            in_specs=[
                pl.BlockSpec((tn, F), lambda i: (i, 0)),         # patch tile
                pl.BlockSpec((F, Dp), lambda i: (0, 0)),         # projection weight (resident)
                pl.BlockSpec((1, Dp), lambda i: (0, 0)),         # bias (f32, resident)
            ],
            out_specs=pl.BlockSpec((tn, Dp), lambda i: (i, 0)),
        ),
        compiler_params=pltpu.CompilerParams(
            dimension_semantics=("parallel",)),
        cost_estimate=cost,
    )(patches, w_flat, b_pad)

    if not unpad_output:
        return out, hw_shape

    tokens = out[:N_tot, :D].reshape(B, Np, D)
    # TODO(synk): norm_layer (e.g. LayerNorm) is None by default in the module;
    # if configured it would be fused here as a second elementwise kernel stage.
    return tokens, hw_shape


def patch_embed_ref(x, w, b, *, stride=4, padding=2):
    """Pure-JAX reference matching the PyTorch forward (f32 conv)."""
    y = jax.lax.conv_general_dilated(
        x, w, window_strides=(stride, stride),
        padding=((padding, padding), (padding, padding)),
        dimension_numbers=("NCHW", "OIHW", "NCHW"))
    y = y + b[None, :, None, None]
    B, D, Hp, Wp = y.shape
    y = jnp.transpose(y.reshape(B, D, Hp * Wp), (0, 2, 1))       # flatten(2).transpose(1, 2)
    return y, (Hp, Wp)


if __name__ == "__main__":
    # Small shapes consistent with the module defaults (kernel=7, stride=4,
    # padding=2, in_chans=3, embed_dim=96) on a 32x32 image -> 8x8 = 64 patches.
    B, C_in, H, W = 2, 3, 32, 32
    D, K, S, P = 96, 7, 4, 2

    root = jax.random.PRNGKey(0)
    kx, kw, kb = jax.random.split(root, 3)
    x = jax.random.normal(kx, (B, C_in, H, W), jnp.float32)
    w = 0.05 * jax.random.normal(kw, (D, C_in, K, K), jnp.float32)
    b = 0.05 * jax.random.normal(kb, (D,), jnp.float32)

    tokens, hw_shape = patch_embed(x, w, b, kernel_size=K, stride=S, padding=P)
    tokens = jax.block_until_ready(tokens)

    ref, hw_ref = patch_embed_ref(x, w, b, stride=S, padding=P)
    assert tuple(hw_shape) == tuple(hw_ref), (hw_shape, hw_ref)
    assert tokens.shape == (B, hw_ref[0] * hw_ref[1], D), tokens.shape
    # bf16 MXU inputs + bf16 output (f32 accumulation) vs f32 conv reference.
    err = jnp.max(jnp.abs(tokens.astype(jnp.float32) - ref))
    assert jnp.allclose(tokens.astype(jnp.float32), ref, atol=3e-2, rtol=3e-2), float(err)

    print("KERNEL_OK")
</pallas_src>

<mosaic_0001>
module attributes {stable_mosaic.version = 11 : i64} {
  func.func @_proj_kernel(%arg0: i32, %arg1: memref<64x147xbf16, #tpu.memory_space<vmem>>, %arg2: memref<147x128xbf16, #tpu.memory_space<vmem>>, %arg3: memref<1x128xf32, #tpu.memory_space<vmem>>, %arg4: memref<64x128xbf16, #tpu.memory_space<vmem>>) attributes {dimension_semantics = [#tpu.dimension_semantics<parallel>], iteration_bounds = array<i64: 2>, scalar_prefetch = 0 : i64, scratch_operands = 0 : i64, tpu.core_type = #tpu.core_type<tc>, window_params = [{transform_indices = @transform_0, window_bounds = array<i64: 64, 147>}, {pipeline_mode = #tpu.pipeline_mode<synchronous>, transform_indices = @transform_1, window_bounds = array<i64: 147, 128>}, {pipeline_mode = #tpu.pipeline_mode<synchronous>, transform_indices = @transform_2, window_bounds = array<i64: 1, 128>}, {transform_indices = @transform_3, window_bounds = array<i64: 64, 128>}]} {
    %c0 = arith.constant 0 : index
    %c0_0 = arith.constant 0 : index
    %0 = vector.load %arg1[%c0, %c0_0] : memref<64x147xbf16, #tpu.memory_space<vmem>>, vector<64x147xbf16>
    %c0_1 = arith.constant 0 : index
    %c0_2 = arith.constant 0 : index
    %1 = vector.load %arg2[%c0_1, %c0_2] : memref<147x128xbf16, #tpu.memory_space<vmem>>, vector<147x128xbf16>
    %cst = arith.constant dense<0.000000e+00> : vector<64x128xf32>
    %2 = tpu.matmul %0, %1, %cst {dimension_numbers = #tpu.dot_dimension_numbers<[1], [0], [0], [1], [0, 0, 1, 1], [], []>} : vector<64x147xbf16>, vector<147x128xbf16>, vector<64x128xf32> -> vector<64x128xf32>
    %c0_3 = arith.constant 0 : index
    %c0_4 = arith.constant 0 : index
    %3 = vector.load %arg3[%c0_3, %c0_4] : memref<1x128xf32, #tpu.memory_space<vmem>>, vector<1x128xf32>
    %4 = vector.broadcast %3 : vector<1x128xf32> to vector<64x128xf32>
    %5 = arith.addf %2, %4 : vector<64x128xf32>
    %6 = arith.truncf %5 : vector<64x128xf32> to vector<64x128xbf16>
    %c0_5 = arith.constant 0 : index
    %c0_6 = arith.constant 0 : index
    %7 = vector.load %arg4[%c0_5, %c0_6] : memref<64x128xbf16, #tpu.memory_space<vmem>>, vector<64x128xbf16>
    tpu.vector_store %arg4[%c0_5, %c0_6], %6 {strides = array<i32>} : memref<64x128xbf16, #tpu.memory_space<vmem>>, vector<64x128xbf16>,
    return
  }
  func.func @transform_0(%arg0: i32) -> (i32, i32) {
    %c0_i32 = arith.constant 0 : i32
    %c0_i32_0 = arith.constant 0 : i32
    return %arg0, %c0_i32 : i32, i32
  }
  func.func @transform_1(%arg0: i32) -> (i32, i32) {
    %c0_i32 = arith.constant 0 : i32
    %c0_i32_0 = arith.constant 0 : i32
    %c0_i32_1 = arith.constant 0 : i32
    return %c0_i32, %c0_i32_0 : i32, i32
  }
  func.func @transform_2(%arg0: i32) -> (i32, i32) {
    %c0_i32 = arith.constant 0 : i32
    %c0_i32_0 = arith.constant 0 : i32
    %c0_i32_1 = arith.constant 0 : i32
    return %c0_i32, %c0_i32_0 : i32, i32
  }
  func.func @transform_3(%arg0: i32) -> (i32, i32) {
    %c0_i32 = arith.constant 0 : i32
    %c0_i32_0 = arith.constant 0 : i32
    return %arg0, %c0_i32 : i32, i32
  }
}

</mosaic_0001>

<llo_original>
// kernel: tpu_custom_call.1
$region0: #{tpu_custom_call.1}
  #allocation0 [shape = 'u32[]', space=smem, size = 0x4, offset = 0x4, fixed_abs, tag = 'smem constant byte address 0x4 - core index']
  #allocation1 [shape = 'u32[72,128]{1,0:T(1,128)}', space=vmem, size = 0x9000, scoped, tag = 'internal scratch']
  %s0 = inlined_call_operand.vmem [shape: bf16[128,147], index: 0, kind: input, shape index: {}]
  %s1 = inlined_call_operand.vmem [shape: bf16[147,128], index: 1, kind: input, shape index: {}]
  %s2 = inlined_call_operand.vmem [shape: f32[1,128], index: 2, kind: input, shape index: {}]
  %s3 = inlined_call_operand.hbm [shape: bf16[128,128], index: 3, kind: output, shape index: {}]
  %s4 = sld [smem:[#allocation0]]
  $region45: #{tpu_custom_call.1} parent=0
    _
  %s6 = ssub.s32 1, %s4
  %s7 = scalar_select 0, %s6, %s4
  $region1: #{tpu_custom_call.1} parent=0
    #allocation2 [shape = 'u8[32768]{0}', space=vmem, size = 0x8000, scoped, tag = 'output window, operand 0']
    #allocation3 [shape = 's32[2]{0}', space=sflag, size = 0x8, scoped, tag = 'scoped memory for tpu_custom_call.1']
    %8 = vsyncpa [#allocation3], 0
    %s9 = scalar_lea.sflag [#allocation3], 1
    %10 = vsyncpa %s9, 0
    loop: start=0, step=1, limit=4
    $region2: #{tpu_custom_call.1} parent=1 // loop_pre_header
      _
    $region3: #{tpu_custom_call.1} parent=1 // loop_header
      %s12 = sphi 0, %s16
      %p13 = scmp.ge.s32.totalorder %s12, 4
      %s22 = sphi 0, %s24
      %s25 = sphi 0, %s22
      %s26 = sphi 0, %s25
      %s42 = sphi 0, %s26
      %s46 = sphi 0, %s46
      %s48 = sphi 0, %s46
      %s49 = sphi 0, %s48
      %s63 = sphi 0, %s49
      %s67 = sphi 0, %s67
      %s69 = sphi 0, %s67
      %s70 = sphi 0, %s69
      %s84 = sphi 0, %s70
      %s90 = sphi 0, %s92
      %s93 = sphi 0, %s90
      %s94 = sphi 0, %s93
      %s110 = sphi 0, %s94
    $region4: #{tpu_custom_call.1} parent=1 // loop_header_branch
      %15 = sbr.rel (%p13) target = $region8
    $region5: #{tpu_custom_call.1} parent=1 // loop_body
      %s17 = ssub.s32 %s12, 1
      %s18 = ssub.s32 %s12, 2
      %s19 = sadd.s32 %s12, 1
      %s20 = ssub.s32 %s12, %s19
      %p21 = scmp.eq.s32.totalorder %s20, 0
      %s23 = sadd.s32 %s22, 1
      %s24 = scalar_select %p21, %s22, %s23
      %p27 = pneg %p21
      %p28 = scmp.eq.s32.totalorder %s12, 1
      %p29 = por %p27, %p28
      %p30 = scmp.ne.s32.totalorder %s22, %s25
      %p31 = scmp.eq.s32.totalorder %s12, 0
      %p32 = por %p30, %p31
      %p33 = scmp.ne.s32.totalorder %s22, %s25
      %p34 = scmp.eq.s32.totalorder %s17, 1
      %p35 = por %p33, %p34
      %p36 = scmp.ne.s32.totalorder %s25, %s26
      %p37 = scmp.eq.s32.totalorder %s17, 0
      %p38 = por %p36, %p37
      %p39 = scmp.ne.s32.totalorder %s25, %s26
      %p40 = scmp.eq.s32.totalorder %s18, 1
      %p41 = por %p39, %p40
      %p43 = scmp.ne.s32.totalorder %s26, %s42
      %p44 = scmp.eq.s32.totalorder %s18, 0
      %p45 = por %p43, %p44
      %s47 = sadd.s32 %s46, 1
      %p50 = scmp.eq.s32.totalorder %s12, 1
      %p51 = scmp.ne.s32.totalorder %s46, %s48
      %p52 = scmp.eq.s32.totalorder %s12, 0
      %p53 = por %p51, %p52
      %p54 = scmp.ne.s32.totalorder %s46, %s48
      %p55 = scmp.eq.s32.totalorder %s17, 1
      %p56 = por %p54, %p55
      %p57 = scmp.ne.s32.totalorder %s48, %s49
      %p58 = scmp.eq.s32.totalorder %s17, 0
      %p59 = por %p57, %p58
      %p60 = scmp.ne.s32.totalorder %s48, %s49
      %p61 = scmp.eq.s32.totalorder %s18, 1
      %p62 = por %p60, %p61
      %p64 = scmp.ne.s32.totalorder %s49, %s63
      %p65 = scmp.eq.s32.totalorder %s18, 0
      %p66 = por %p64, %p65
      %s68 = sadd.s32 %s67, 1
      %p71 = scmp.eq.s32.totalorder %s12, 1
      %p72 = scmp.ne.s32.totalorder %s67, %s69
      %p73 = scmp.eq.s32.totalorder %s12, 0
      %p74 = por %p72, %p73
      %p75 = scmp.ne.s32.totalorder %s67, %s69
      %p76 = scmp.eq.s32.totalorder %s17, 1
      %p77 = por %p75, %p76
      %p78 = scmp.ne.s32.totalorder %s69, %s70
      %p79 = scmp.eq.s32.totalorder %s17, 0
      %p80 = por %p78, %p79
      %p81 = scmp.ne.s32.totalorder %s69, %s70
      %p82 = scmp.eq.s32.totalorder %s18, 1
      %p83 = por %p81, %p82
      %p85 = scmp.ne.s32.totalorder %s70, %s84
      %p86 = scmp.eq.s32.totalorder %s18, 0
      %p87 = por %p85, %p86
      %s88 = ssub.s32 %s12, %s19
      %p89 = scmp.eq.s32.totalorder %s88, 0
      %s91 = sadd.s32 %s90, 1
      %s92 = scalar_select %p89, %s90, %s91
      %p95 = pneg %p89
      %p96 = scmp.eq.s32.totalorder %s12, 1
      %p97 = por %p95, %p96
      %p98 = scmp.ne.s32.totalorder %s90, %s93
      %p99 = scmp.eq.s32.totalorder %s12, 0
      %p100 = por %p98, %p99
      %p101 = scmp.ne.s32.totalorder %s90, %s93
      %p102 = scmp.eq.s32.totalorder %s17, 1
      %p103 = por %p101, %p102
      %p104 = scmp.ne.s32.totalorder %s93, %s94
      %p105 = scmp.eq.s32.totalorder %s17, 0
      %p106 = por %p104, %p105
      %p107 = scmp.ne.s32.totalorder %s93, %s94
      %p108 = scmp.eq.s32.totalorder %s18, 1
      %p109 = por %p107, %p108
      %p111 = scmp.ne.s32.totalorder %s94, %s110
      %p112 = scmp.eq.s32.totalorder %s18, 0
      %p113 = por %p111, %p112
      %p114 = scmp.le.s32.totalorder 1, %s12
      %p115 = scmp.lt.s32.totalorder %s12, 3
      %p116 = pnand %p114, %p115
      %p117 = pneg %p116
      // Predicated region
      $region9: #{tpu_custom_call.1} parent=5 // pred_check
        _
      $region10: #{tpu_custom_call.1} parent=5 // pred_check_branch
        %119 = sbr.rel (%p116) target = $region12
      $region11: #{tpu_custom_call.1} parent=5 // pred_region
        %s120 = ssub.s32 %s12, 1
        // Predicated region
        $region13: #{tpu_custom_call.1} parent=11 // pred_check
          %p121 = pneg %p59
        $region14: #{tpu_custom_call.1} parent=11 // pred_check_branch
          %123 = sbr.rel (%p121) target = $region16
        $region15: #{tpu_custom_call.1} parent=11 // pred_region
          _
        $region16: #{tpu_custom_call.1} parent=11 // pred_fallthru
          _
        // Predicated region
        $region17: #{tpu_custom_call.1} parent=11 // pred_check
          %p124 = pneg %p80
        $region18: #{tpu_custom_call.1} parent=11 // pred_check_branch
          %126 = sbr.rel (%p124) target = $region20
        $region19: #{tpu_custom_call.1} parent=11 // pred_region
          _
        $region20: #{tpu_custom_call.1} parent=11 // pred_fallthru
          _
      $region12: #{tpu_custom_call.1} parent=5 // pred_fallthru
        _
      %p127 = scmp.lt.s32.totalorder %s12, 2
      // Predicated region
      $region21: #{tpu_custom_call.1} parent=5 // pred_check
        %p128 = pneg %p127
      $region22: #{tpu_custom_call.1} parent=5 // pred_check_branch
        %130 = sbr.rel (%p128) target = $region24
      $region23: #{tpu_custom_call.1} parent=5 // pred_region
        // Predicated region
        $region25: #{tpu_custom_call.1} parent=23 // pred_check
          %p131 = pneg %p32
        $region26: #{tpu_custom_call.1} parent=23 // pred_check_branch
          %133 = sbr.rel (%p131) target = $region28
        $region27: #{tpu_custom_call.1} parent=23 // pred_region
          %s134 = smul.u32 8, %s12
          %p135 = scmp.lt.s32.totalorder %s134, 15
          %s136 = scalar_select %p135, %s134, 15
          %s137 = smul.addr %s136, 2
          %s138 = smul.addr %s137, 4
          %s139 = scalar_lea.vmem %s0, %s138
          %s140 = smul.u32 8, %s12
        $region28: #{tpu_custom_call.1} parent=23 // pred_fallthru
          _
      $region24: #{tpu_custom_call.1} parent=5 // pred_fallthru
        _
      %p141 = scmp.le.s32.totalorder 1, %s12
      %p142 = scmp.lt.s32.totalorder %s12, 3
      %p143 = pnand %p141, %p142
      %p144 = pneg %p143
      // Predicated region
      $region29: #{tpu_custom_call.1} parent=5 // pred_check
        _
      $region30: #{tpu_custom_call.1} parent=5 // pred_check_branch
        %146 = sbr.rel (%p143) target = $region32
      $region31: #{tpu_custom_call.1} parent=5 // pred_region
        %s147 = ssub.s32 %s12, 1
        %s148 = smul.u32 8, %s17
        %p149 = scmp.lt.s32.totalorder %s148, 15
        %s150 = scalar_select %p149, %s148, 15
        %s151 = smul.addr %s150, 2
        %s152 = smul.addr %s151, 4
        %s153 = scalar_lea.vmem %s0, %s152
        %p154 = pneg %p38
        %p155 = pneg %p35
        %p156 = pneg %p59
        %p157 = pneg %p56
        %p158 = pneg %p80
        %p159 = pneg %p77
        %p160 = pneg %p106
        %p161 = pneg %p103
        %s162 = sand.u32 %s93, 1
        %s163 = scalar_lea.sflag [#allocation3], %s162
        %s164 = sand.u32 %s93, 1
        %s165 = smul.addr %s164, 32
        %s166 = scalar_lea.vmem [#allocation2], %s165
        %s167 = smul.u32 8, %s17
        %p168 = scmp.lt.s32.totalorder %s167, 15
        %s169 = scalar_select %p168, %s167, 15
        %s170 = smul.addr %s169, 2
        %s171 = smul.addr %s170, 4
        %s172 = scalar_lea.vmem %s0, %s171
        %s173 = smul.u32 8, %s17
        %s174 = smul.u32 8, %s17
        %v176 = vld [vmem:[%s172] sm:$0xff]
        %v177 = vld [vmem:[%s172 + $0x8] sm:$0xff]
        %v178 = vld [vmem:[%s172 + $0x10] sm:$0xff]
        %v179 = vld [vmem:[%s172 + $0x18] sm:$0xff]
        %v180 = vld [vmem:[%s172 + $0x20] sm:$0xff]
        %v181 = vld [vmem:[%s172 + $0x28] sm:$0xff]
        %v182 = vld [vmem:[%s172 + $0x30] sm:$0xff]
        %v183 = vld [vmem:[%s172 + $0x38] sm:$0xff]
        %v184 = vld [vmem:[%s1] sm:$0xf]
        %v185 = vld [vmem:[%s1 + $0x4] sm:$0xf]
        %v186 = vld [vmem:[%s1 + $0x8] sm:$0xf]
        %v187 = vld [vmem:[%s1 + $0xc] sm:$0xf]
        %v188 = vld [vmem:[%s1 + $0x10] sm:$0xf]
        %v189 = vld [vmem:[%s1 + $0x14] sm:$0xf]
        %v190 = vld [vmem:[%s1 + $0x18] sm:$0xf]
        %v191 = vld [vmem:[%s1 + $0x1c] sm:$0xf]
        %v192 = vld [vmem:[%s1 + $0x20] sm:$0xf]
        %v193 = vld [vmem:[%s1 + $0x24] sm:$0xf]
        %v194 = vld [vmem:[%s1 + $0x28] sm:$0xf]
        %v195 = vld [vmem:[%s1 + $0x2c] sm:$0xf]
        %v196 = vld [vmem:[%s1 + $0x30] sm:$0xf]
        %v197 = vld [vmem:[%s1 + $0x34] sm:$0xf]
        %v198 = vld [vmem:[%s1 + $0x38] sm:$0xf]
        %v199 = vld [vmem:[%s1 + $0x3c] sm:$0xf]
        %v200 = vld [vmem:[%s1 + $0x40] sm:$0xf]
        %v201 = vld [vmem:[%s1 + $0x44] sm:$0xf]
        %v202 = vld [vmem:[%s1 + $0x48] sm:$0x3]
        %v203 = vld [vmem:[%s2] sm:$0x1]
        %v205 = vperm.slane %v203, 0
        %v215 = vunpack.c.l.b16 %v176
        %v216 = vunpack.c.h.b16 %v176
        %v217 = vunpack.c.l.b16 %v177
        %v218 = vunpack.c.h.b16 %v177
        %v219 = vunpack.c.l.b16 %v178
        %v220 = vunpack.c.h.b16 %v178
        %v221 = vunpack.c.l.b16 %v179
        %v222 = vunpack.c.h.b16 %v179
        %v223 = vunpack.c.l.b16 %v180
        %v224 = vunpack.c.h.b16 %v180
        %v225 = vunpack.c.l.b16 %v181
        %v226 = vunpack.c.h.b16 %v181
        %v227 = vunpack.c.l.b16 %v182
        %v228 = vunpack.c.h.b16 %v182
        %v229 = vunpack.c.l.b16 %v183
        %v230 = vunpack.c.h.b16 %v183
        %v231 = vpack.c.b16 %v217, %v215
        %v232 = vpack.c.b16 %v218, %v216
        %v233 = vpack.c.b16 %v221, %v219
        %v234 = vpack.c.b16 %v222, %v220
        %v235 = vpack.c.b16 %v225, %v223
        %v236 = vpack.c.b16 %v226, %v224
        %v237 = vpack.c.b16 %v229, %v227
        %v238 = vpack.c.b16 %v230, %v228
        %v262 = vunpack.c.l.b16 %v184
        %v263 = vunpack.c.l.b16 %v185
        %v264 = vunpack.c.l.b16 %v186
        %v265 = vunpack.c.l.b16 %v187
        %v266 = vunpack.c.l.b16 %v188
        %v267 = vunpack.c.l.b16 %v189
        %v268 = vunpack.c.l.b16 %v190
        %v269 = vunpack.c.l.b16 %v191
        %v270 = vunpack.c.l.b16 %v192
        %v271 = vunpack.c.l.b16 %v193
        %v272 = vunpack.c.l.b16 %v194
        %v273 = vunpack.c.l.b16 %v195
        %v274 = vunpack.c.l.b16 %v196
        %v275 = vunpack.c.l.b16 %v197
        %v276 = vunpack.c.l.b16 %v198
        %v277 = vunpack.c.l.b16 %v199
        %v278 = vunpack.c.l.b16 %v200
        %v279 = vunpack.c.l.b16 %v201
        %v280 = vunpack.c.l.b16 %v202
        %v281 = vpack.c.b16 %v263, %v262
        %v282 = vpack.c.b16 %v265, %v264
        %v283 = vpack.c.b16 %v267, %v266
        %v284 = vpack.c.b16 %v269, %v268
        %v285 = vpack.c.b16 %v271, %v270
        %v286 = vpack.c.b16 %v273, %v272
        %v287 = vpack.c.b16 %v275, %v274
        %v288 = vpack.c.b16 %v277, %v276
        %v289 = vpack.c.b16 %v279, %v278
        %v290 = vpack.c.b16 %v280, %v280
        %vm300 = vcmask 154624
        %v302 = vsel %vm300, %v232, 0
        %v305 = vsel %vm300, %v234, 0
        %v308 = vsel %vm300, %v236, 0
        %v311 = vsel %vm300, %v238, 0
        %vm313 = vcmask 1040384
        %vm314 = vcmask 1041408
        %v315 = vsel %vm313, 4294967295, 65535
        %v316 = vsel %vm314, %v315, 0
        %v318 = vand.u32 %v290, %v316
        %320 = vmatpush.bf16.msra.mxu0 %v288
        %321 = vmatpush.bf16.msra.mxu0 %v287
        %322 = vmatpush.bf16.msra.mxu0 %v286
        %323 = vmatpush.bf16.msra.mxu0 %v285
        %324 = vmatpush.bf16.msra.mxu0 %v284
        %325 = vmatpush.bf16.msra.mxu0 %v283
        %326 = vmatpush.bf16.msra.mxu0 %v282
        %327 = vmatpush.bf16.msra.mxu0 %v281
        %328 = vmatmul.bf16.gmra.mxu0 %v231
        %v329 = vpop.f32.mrf.mxu0
        %v330 = vadd.f32 %v205, %v329
        %v331 = vpop.f32.mrf.mxu0
        %v332 = vadd.f32 %v205, %v331
        %333 = vmatmul.bf16.gmra.mxu0 %v233
        %v334 = vpop.f32.mrf.mxu0
        %v335 = vadd.f32 %v205, %v334
        %v336 = vpop.f32.mrf.mxu0
        %v337 = vadd.f32 %v205, %v336
        %338 = vmatmul.bf16.gmra.mxu0 %v235
        %v339 = vpop.f32.mrf.mxu0
        %v340 = vadd.f32 %v205, %v339
        %v341 = vpop.f32.mrf.mxu0
        %v342 = vadd.f32 %v205, %v341
        %343 = vmatmul.bf16.gmra.mxu0 %v237
        %v344 = vpop.f32.mrf.mxu0
        %v345 = vadd.f32 %v205, %v344
        %v346 = vpop.f32.mrf.mxu0
        %v347 = vadd.f32 %v205, %v346
        %348 = vdwg.mxu0
        %349 = vmatpush.bf16.msra.mxu0 0
        %350 = vmatpush.bf16.msra.mxu0 0
        %351 = vmatpush.bf16.msra.mxu0 0
        %352 = vmatpush.bf16.msra.mxu0 0
        %353 = vmatpush.bf16.msra.mxu0 0
        %354 = vmatpush.bf16.msra.mxu0 0
        %355 = vmatpush.bf16.msra.mxu0 %v318
        %356 = vmatpush.bf16.msra.mxu0 %v289
        %357 = vmatmul.bf16.gmra.mxu0 %v302
        %v358 = vpop.f32.mrf.mxu0
        %v359 = vadd.f32 %v330, %v358
        %v360 = vpop.f32.mrf.mxu0
        %v361 = vadd.f32 %v332, %v360
        %362 = vmatmul.bf16.gmra.mxu0 %v305
        %v363 = vpop.f32.mrf.mxu0
        %v364 = vadd.f32 %v335, %v363
        %v365 = vpop.f32.mrf.mxu0
        %v366 = vadd.f32 %v337, %v365
        %367 = vmatmul.bf16.gmra.mxu0 %v308
        %v368 = vpop.f32.mrf.mxu0
        %v369 = vadd.f32 %v340, %v368
        %v370 = vpop.f32.mrf.mxu0
        %v371 = vadd.f32 %v342, %v370
        %372 = vmatmul.bf16.gmra.mxu0 %v311
        %v373 = vpop.f32.mrf.mxu0
        %v374 = vadd.f32 %v345, %v373
        %v375 = vpop.f32.mrf.mxu0
        %v376 = vadd.f32 %v347, %v375
        %377 = vdwg.mxu0
        %v378 = vpack.c.bf16 %v359, %v359
        %v379 = vpack.c.bf16 %v361, %v361
        %v380 = vpack.c.bf16 %v364, %v364
        %v381 = vpack.c.bf16 %v366, %v366
        %v382 = vpack.c.bf16 %v369, %v369
        %v383 = vpack.c.bf16 %v371, %v371
        %v384 = vpack.c.bf16 %v374, %v374
        %v385 = vpack.c.bf16 %v376, %v376
        %386 = vst [vmem:[%s166] sm:$0xf] %v378
        %387 = vst [vmem:[%s166 + $0x4] sm:$0xf] %v379
        %388 = vst [vmem:[%s166 + $0x8] sm:$0xf] %v380
        %389 = vst [vmem:[%s166 + $0xc] sm:$0xf] %v381
        %390 = vst [vmem:[%s166 + $0x10] sm:$0xf] %v382
        %391 = vst [vmem:[%s166 + $0x14] sm:$0xf] %v383
        %392 = vst [vmem:[%s166 + $0x18] sm:$0xf] %v384
        %393 = vst [vmem:[%s166 + $0x1c] sm:$0xf] %v385
        %s394 = sand.u32 %s93, 1
        %s395 = scalar_lea.sflag [#allocation3], %s394
        %s396 = sand.u32 %s93, 1
        %s397 = smul.addr %s396, 32
        %s398 = scalar_lea.vmem [#allocation2], %s397
        // Predicated region
        $region33: #{tpu_custom_call.1} parent=31 // pred_check
          %p399 = pneg %p103
        $region34: #{tpu_custom_call.1} parent=31 // pred_check_branch
          %401 = sbr.rel (%p399) target = $region36
        $region35: #{tpu_custom_call.1} parent=31 // pred_region
          %s402 = smul.u32 8, %s17
          %404 = vsyncadd %s395, 0
          %s405 = smul.addr %s402, 4
          %s406 = scalar_lea.hbm %s3, %s405
          %s407 = sshll.u32 %s398, 4
          %s408 = int_to_ptr.vmem [resolvable:$true] %s407
          %s409 = sshll.u32 %s406, 4
          %s410 = int_to_ptr.hbm [resolvable:$true] %s409
          %415 = dma.vmem_to_hbm [thread:$0]  %s408, 512, %s410, %s395, 64, 64, 4
        $region36: #{tpu_custom_call.1} parent=31 // pred_fallthru
          _
      $region32: #{tpu_custom_call.1} parent=5 // pred_fallthru
        _
      %p416 = scmp.le.s32.totalorder 2, %s12
      // Predicated region
      $region37: #{tpu_custom_call.1} parent=5 // pred_check
        %p417 = pneg %p416
      $region38: #{tpu_custom_call.1} parent=5 // pred_check_branch
        %419 = sbr.rel (%p417) target = $region40
      $region39: #{tpu_custom_call.1} parent=5 // pred_region
        %s420 = ssub.s32 %s12, 2
        // Predicated region
        $region41: #{tpu_custom_call.1} parent=39 // pred_check
          %p421 = pneg %p109
        $region42: #{tpu_custom_call.1} parent=39 // pred_check_branch
          %423 = sbr.rel (%p421) target = $region44
        $region43: #{tpu_custom_call.1} parent=39 // pred_region
          %s424 = sand.u32 %s94, 1
          %s425 = scalar_lea.sflag [#allocation3], %s424
          %s426 = sand.u32 %s94, 1
          %s427 = smul.addr %s426, 32
          %s428 = scalar_lea.vmem [#allocation2], %s427
          %430 = dma.done %s425, 512
        $region44: #{tpu_custom_call.1} parent=39 // pred_fallthru
          _
      $region40: #{tpu_custom_call.1} parent=5 // pred_fallthru
        _
    $region6: #{tpu_custom_call.1} parent=1 // loop_footer
      %s16 = sadd.s32 1, %s12
    $region7: #{tpu_custom_call.1} parent=1 // loop_footer_branch
      %11 = sbr.rel target = $region3
    $region8: #{tpu_custom_call.1} parent=1 // loop_exit
      _
    %431 = vsyncpa [#allocation3], 1
    %s432 = scalar_lea.sflag [#allocation3], 1
    %433 = vsyncpa %s432, 1

</llo_original>
